<compile_context>
chip_gen: v7x
topology: tpu7x:2x2x1
jax: 0.10.0
libtpu: 0.0.40
codegen_flags: <defaults>
</compile_context>

<pallas_src>
import math

import jax
import jax.numpy as jnp
from jax.experimental import pallas as pl
from jax.experimental.pallas import tpu as pltpu

EPSILON = 1e-8
_LANE = 128


def _round_up(n, m):
    return ((n + m - 1) // m) * m


def _e2efs_mask_kernel(thresh_ref, x_ref, k_ref, o_ref):
    # thresh_ref: SMEM (1,) scalar = eps * max(|kernel|)
    # x_ref: (TB, TF), k_ref: (1, TF), o_ref: (TB, TF)  -- VMEM tiles.
    k = k_ref[...]
    thresh = thresh_ref[0]
    # k / max_abs < eps  <=>  k < eps * max_abs  (max_abs > 0); for the
    # all-zero kernel both forms yield s == 0, matching the reference.
    s = jnp.where(k < thresh, jnp.zeros_like(k), k)
    o_ref[...] = x_ref[...] * s


def e2efs_mask_forward(x, kernel, eps=EPSILON):
    """x: (B, *input_shape) float32; kernel: input_shape float32."""
    B = x.shape[0]
    F = int(math.prod(x.shape[1:]))
    x2 = x.reshape(B, F)
    k2 = kernel.reshape(1, F).astype(x.dtype)

    # ---- tile-size selection (lane-dense, fits default scoped VMEM) ----
    TF_TARGET = 2048   # lanes per tile (multiple of 128)
    TB_TARGET = 256    # rows per tile
    if F <= TF_TARGET:
        Fp = _round_up(F, _LANE)
        TF = Fp
    else:
        TF = TF_TARGET
        Fp = _round_up(F, TF)
    if B <= TB_TARGET:
        Bp = B
        TB = B                         # full-dim block (allowed even if not %8)
    else:
        TB = TB_TARGET
        Bp = _round_up(B, TB)

    if (Bp, Fp) != (B, F):
        x2 = jnp.pad(x2, ((0, Bp - B), (0, Fp - F)))
        k2 = jnp.pad(k2, ((0, 0), (0, Fp - F)))

    # Global reduction hoisted out of the kernel; passed as an SMEM scalar.
    max_abs = jnp.max(jnp.abs(kernel)).astype(jnp.float32)
    thresh = jnp.reshape(eps * max_abs, (1,)).astype(jnp.float32)

    grid = (Bp // TB, Fp // TF)
    itemsize = jnp.dtype(x.dtype).itemsize
    cost = pl.CostEstimate(
        flops=2 * Bp * Fp,
        transcendentals=0,
        bytes_accessed=(2 * Bp * Fp + Fp) * itemsize,
    )

    out = pl.pallas_call(
        _e2efs_mask_kernel,
        out_shape=jax.ShapeDtypeStruct((Bp, Fp), x.dtype),
        grid_spec=pltpu.PrefetchScalarGridSpec(
            num_scalar_prefetch=1,
            grid=grid,
            in_specs=[
                pl.BlockSpec((TB, TF), lambda i, j, thr: (i, j)),
                pl.BlockSpec((1, TF), lambda i, j, thr: (0, j)),
            ],
            out_specs=pl.BlockSpec((TB, TF), lambda i, j, thr: (i, j)),
        ),
        compiler_params=pltpu.CompilerParams(
            dimension_semantics=("parallel", "parallel")),
        cost_estimate=cost,
    )(thresh, x2, k2)

    if (Bp, Fp) != (B, F):
        out = out[:B, :F]
    return out.reshape(x.shape)


def reference_forward(x, kernel, eps=EPSILON):
    max_abs = jnp.max(jnp.abs(kernel))
    t = kernel / max_abs
    s = jnp.where(t < eps, jnp.zeros_like(kernel), kernel)
    return x * s[None, ...]


if __name__ == "__main__":
    key = jax.random.PRNGKey(0)
    kx, kk = jax.random.split(key)

    B, C, H, W = 2, 4, 16, 16            # input_shape = (C, H, W)
    x = jax.random.normal(kx, (B, C, H, W), dtype=jnp.float32)

    # Parameter init as in __init__: kernel = ones(input_shape).  Perturb a
    # few entries deterministically so the thresholding path is exercised.
    kernel = jnp.ones((C, H, W), dtype=jnp.float32)
    perturb = jax.random.uniform(kk, (C, H, W), dtype=jnp.float32)
    # zero-out ~10% of the kernel entries (these will be masked since t < eps)
    kernel = jnp.where(perturb < 0.1, 0.0, kernel * (0.5 + 0.5 * perturb))

    out = e2efs_mask_forward(x, kernel)
    out = jax.block_until_ready(out)

    ref = reference_forward(x, kernel)
    assert out.shape == (B, C, H, W)
    assert jnp.allclose(out, ref, atol=1e-6, rtol=1e-6), "mismatch vs reference"

    print("KERNEL_OK")
</pallas_src>

<mosaic_0001>
module attributes {stable_mosaic.version = 11 : i64} {
  func.func @_e2efs_mask_kernel(%arg0: i32, %arg1: i32, %arg2: memref<1xf32, #tpu.memory_space<smem>>, %arg3: memref<2x1024xf32, #tpu.memory_space<vmem>>, %arg4: memref<1x1024xf32, #tpu.memory_space<vmem>>, %arg5: memref<2x1024xf32, #tpu.memory_space<vmem>>) attributes {dimension_semantics = [#tpu.dimension_semantics<parallel>, #tpu.dimension_semantics<parallel>], iteration_bounds = array<i64: 1, 1>, scalar_prefetch = 1 : i64, scratch_operands = 0 : i64, tpu.core_type = #tpu.core_type<tc>, window_params = [{transform_indices = @transform_0, window_bounds = array<i64: 2, 1024>}, {transform_indices = @transform_1, window_bounds = array<i64: 1, 1024>}, {transform_indices = @transform_2, window_bounds = array<i64: 2, 1024>}]} {
    %c0 = arith.constant 0 : index
    %c0_0 = arith.constant 0 : index
    %0 = vector.load %arg4[%c0, %c0_0] : memref<1x1024xf32, #tpu.memory_space<vmem>>, vector<1x1024xf32>
    %c0_1 = arith.constant 0 : index
    %1 = memref.load %arg2[%c0_1] : memref<1xf32, #tpu.memory_space<smem>>
    %2 = vector.broadcast %1 : f32 to vector<1x1024xf32>
    %3 = arith.cmpf olt, %0, %2 : vector<1x1024xf32>
    %cst = arith.constant 0.000000e+00 : f32
    %4 = vector.broadcast %cst : f32 to vector<1x1024xf32>
    %5 = arith.select %3, %4, %0 : vector<1x1024xi1>, vector<1x1024xf32>
    %c0_2 = arith.constant 0 : index
    %c0_3 = arith.constant 0 : index
    %6 = vector.load %arg3[%c0_2, %c0_3] : memref<2x1024xf32, #tpu.memory_space<vmem>>, vector<2x1024xf32>
    %7 = vector.broadcast %5 : vector<1x1024xf32> to vector<2x1024xf32>
    %8 = arith.mulf %6, %7 : vector<2x1024xf32>
    %c0_4 = arith.constant 0 : index
    %c0_5 = arith.constant 0 : index
    %9 = vector.load %arg5[%c0_4, %c0_5] : memref<2x1024xf32, #tpu.memory_space<vmem>>, vector<2x1024xf32>
    tpu.vector_store %arg5[%c0_4, %c0_5], %8 {strides = array<i32>} : memref<2x1024xf32, #tpu.memory_space<vmem>>, vector<2x1024xf32>,
    return
  }
  func.func @transform_0(%arg0: i32, %arg1: i32, %arg2: memref<1xf32, #tpu.memory_space<smem>>) -> (i32, i32) {
    %c0_i32 = arith.constant 0 : i32
    return %arg0, %arg1 : i32, i32
  }
  func.func @transform_1(%arg0: i32, %arg1: i32, %arg2: memref<1xf32, #tpu.memory_space<smem>>) -> (i32, i32) {
    %c0_i32 = arith.constant 0 : i32
    %c0_i32_0 = arith.constant 0 : i32
    return %c0_i32, %arg1 : i32, i32
  }
  func.func @transform_2(%arg0: i32, %arg1: i32, %arg2: memref<1xf32, #tpu.memory_space<smem>>) -> (i32, i32) {
    %c0_i32 = arith.constant 0 : i32
    return %arg0, %arg1 : i32, i32
  }
}

</mosaic_0001>

<llo_original>
// kernel: tpu_custom_call.1
$region0: #{tpu_custom_call.1}
  #allocation0 [shape = 'u32[]', space=smem, size = 0x4, offset = 0x4, fixed_abs, tag = 'smem constant byte address 0x4 - core index']
  #allocation1 [shape = 'u32[144,128]{1,0:T(1,128)}', space=vmem, size = 0x12000, scoped, tag = 'internal scratch']
  #allocation2 [shape = 's32[1]{0}', space=sflag, size = 0x4, scoped, tag = 'scoped memory for tpu_custom_call.1']
  #allocation3 [shape = 'f32[1]{0:T(128)S(6)}', space=smem, size = 0x200, scoped, tag = 'prefetched SMEM operand 0']
  %s0 = inlined_call_operand.<no memory space> [shape: f32[1], index: 0, kind: input, shape index: {}]
  %s1 = inlined_call_operand.hbm [shape: f32[2,1024], index: 1, kind: input, shape index: {}]
  %s2 = inlined_call_operand.hbm [shape: f32[1,1024], index: 2, kind: input, shape index: {}]
  %s3 = inlined_call_operand.hbm [shape: f32[2,1024], index: 3, kind: output, shape index: {}]
  %s4 = sld [smem:[#allocation0]]
  $region26: #{tpu_custom_call.1} parent=0
    _
  %s6 = ssub.s32 1, %s4
  %s7 = scalar_select 0, %s6, %s4
  %8 = sst [smem:[#allocation3]] %s0
  $region1: #{tpu_custom_call.1} parent=0
    #allocation4 [shape = 'u8[8192]{0}', space=vmem, size = 0x2000, scoped, tag = 'input window, operand 1, single buffered']
    #allocation5 [shape = 's32[1]{0}', space=sflag, size = 0x4, scoped, tag = 'scoped memory for tpu_custom_call.1']
    #allocation6 [shape = 's32[1]{0}', space=sflag, size = 0x4, scoped, tag = 'scoped memory for tpu_custom_call.1']
    #allocation7 [shape = 'u8[4096]{0}', space=vmem, size = 0x1000, scoped, tag = 'input window, operand 2, single buffered']
    #allocation8 [shape = 's32[1]{0}', space=sflag, size = 0x4, scoped, tag = 'scoped memory for tpu_custom_call.1']
    #allocation9 [shape = 'u8[8192]{0}', space=vmem, size = 0x2000, scoped, tag = 'output window, operand 0, single buffered']
    %9 = vsyncpa [#allocation5], 0
    %10 = vsyncpa [#allocation8], 0
    %11 = vsyncpa [#allocation6], 0
    // Predicated region
    $region2: #{tpu_custom_call.1} parent=1 // pred_check
      _
    $region3: #{tpu_custom_call.1} parent=1 // pred_check_branch
      %13 = sbr.rel (0) target = $region5
    $region4: #{tpu_custom_call.1} parent=1 // pred_region
      %s15 = ssub.s32 256, 256
      %16 = vsyncadd [#allocation5], %s15
      %s18 = sshll.u32 [#allocation4], 4
      %s19 = int_to_ptr.vmem [resolvable:$true] %s18
      %21 = dma.hbm_to_vmem [thread:$0]  %s1, 256, %s19, [#allocation5]
    $region5: #{tpu_custom_call.1} parent=1 // pred_fallthru
      _
    // Predicated region
    $region6: #{tpu_custom_call.1} parent=1 // pred_check
      _
    $region7: #{tpu_custom_call.1} parent=1 // pred_check_branch
      %23 = sbr.rel (0) target = $region9
    $region8: #{tpu_custom_call.1} parent=1 // pred_region
      %s25 = ssub.s32 128, 128
      %26 = vsyncadd [#allocation8], %s25
      %s28 = sshll.u32 [#allocation7], 4
      %s29 = int_to_ptr.vmem [resolvable:$true] %s28
      %31 = dma.hbm_to_vmem [thread:$0]  %s2, 128, %s29, [#allocation8]
    $region9: #{tpu_custom_call.1} parent=1 // pred_fallthru
      _
    // Predicated region
    $region10: #{tpu_custom_call.1} parent=1 // pred_check
      _
    $region11: #{tpu_custom_call.1} parent=1 // pred_check_branch
      %33 = sbr.rel (0) target = $region13
    $region12: #{tpu_custom_call.1} parent=1 // pred_region
      %34 = dma.done [#allocation5], 256
    $region13: #{tpu_custom_call.1} parent=1 // pred_fallthru
      _
    // Predicated region
    $region14: #{tpu_custom_call.1} parent=1 // pred_check
      _
    $region15: #{tpu_custom_call.1} parent=1 // pred_check_branch
      %36 = sbr.rel (0) target = $region17
    $region16: #{tpu_custom_call.1} parent=1 // pred_region
      %37 = dma.done [#allocation8], 128
    $region17: #{tpu_custom_call.1} parent=1 // pred_fallthru
      _
    %v38 = vld [vmem:[#allocation7] sm:$0xff]
    %s39 = sld [smem:[#allocation3]]
    %v40 = vstv %s39
    %vm41 = vcmp.lt.f32.partialorder %v38, %v40
    %v42 = vsel %vm41, 0.0, %v38
    %v43 = vld [vmem:[#allocation4] sm:$0xff]
    %v44 = vld [vmem:[#allocation4 + $0x8] sm:$0xff]
    %v46 = vlaneseq
    %v47 = vshrl.u32 %v46, 7
    %v48 = vsub.s32 0, %v47
    %v49 = vrot.slane %v42, %v48
    %v50 = vlaneseq
    %v51 = vshrl.u32 %v50, 7
    %v52 = vsub.s32 1, %v51
    %v53 = vrot.slane %v42, %v52
    %v54 = vlaneseq
    %v55 = vshrl.u32 %v54, 7
    %v56 = vsub.s32 2, %v55
    %v57 = vrot.slane %v42, %v56
    %v58 = vlaneseq
    %v59 = vshrl.u32 %v58, 7
    %v60 = vsub.s32 3, %v59
    %v61 = vrot.slane %v42, %v60
    %v62 = vlaneseq
    %v63 = vshrl.u32 %v62, 7
    %v64 = vsub.s32 4, %v63
    %v65 = vrot.slane %v42, %v64
    %v66 = vlaneseq
    %v67 = vshrl.u32 %v66, 7
    %v68 = vsub.s32 5, %v67
    %v69 = vrot.slane %v42, %v68
    %v70 = vlaneseq
    %v71 = vshrl.u32 %v70, 7
    %v72 = vsub.s32 6, %v71
    %v73 = vrot.slane %v42, %v72
    %v74 = vlaneseq
    %v75 = vshrl.u32 %v74, 7
    %v76 = vsub.s32 7, %v75
    %v77 = vrot.slane %v42, %v76
    %v78 = vcombine.low %v49, %v53
    %v79 = vcombine.low %v57, %v61
    %v81 = vunpack.c.l.s4 1983009808
    %v82 = vunpack.c.0.s8 %v81
    %v83 = vlaneseq
    %v84 = vshrl.u32 %v83, 7
    %v85 = vsub.s32 %v82, %v84
    %v86 = vrot.slane %v78, %v85
    %v88 = vunpack.c.l.s4 1983009808
    %v89 = vunpack.c.0.s8 %v88
    %v90 = vlaneseq
    %v91 = vshrl.u32 %v90, 7
    %v92 = vsub.s32 %v89, %v91
    %v93 = vrot.slane %v79, %v92
    %v94 = vcombine.low %v86, %v93
    %v95 = vcombine.low %v65, %v69
    %v96 = vcombine.low %v73, %v77
    %v98 = vunpack.c.l.s4 1983009808
    %v99 = vunpack.c.0.s8 %v98
    %v100 = vlaneseq
    %v101 = vshrl.u32 %v100, 7
    %v102 = vsub.s32 %v99, %v101
    %v103 = vrot.slane %v95, %v102
    %v105 = vunpack.c.l.s4 1983009808
    %v106 = vunpack.c.0.s8 %v105
    %v107 = vlaneseq
    %v108 = vshrl.u32 %v107, 7
    %v109 = vsub.s32 %v106, %v108
    %v110 = vrot.slane %v96, %v109
    %v111 = vcombine.low %v103, %v110
    %v114 = vmul.f32 %v43, %v94
    %v115 = vmul.f32 %v44, %v111
    %116 = vst [vmem:[#allocation9] sm:$0xff] %v114
    %117 = vst [vmem:[#allocation9 + $0x8] sm:$0xff] %v115
    // Predicated region
    $region18: #{tpu_custom_call.1} parent=1 // pred_check
      _
    $region19: #{tpu_custom_call.1} parent=1 // pred_check_branch
      %119 = sbr.rel (0) target = $region21
    $region20: #{tpu_custom_call.1} parent=1 // pred_region
      %s121 = ssub.s32 256, 256
      %122 = vsyncadd [#allocation6], %s121
      %s124 = sshll.u32 [#allocation9], 4
      %s125 = int_to_ptr.vmem [resolvable:$true] %s124
      %127 = dma.vmem_to_hbm [thread:$0]  %s125, 256, %s3, [#allocation6]
    $region21: #{tpu_custom_call.1} parent=1 // pred_fallthru
      _
    // Predicated region
    $region22: #{tpu_custom_call.1} parent=1 // pred_check
      _
    $region23: #{tpu_custom_call.1} parent=1 // pred_check_branch
      %129 = sbr.rel (0) target = $region25
    $region24: #{tpu_custom_call.1} parent=1 // pred_region
      %130 = dma.done [#allocation6], 256
    $region25: #{tpu_custom_call.1} parent=1 // pred_fallthru
      _
    %131 = vsyncpa [#allocation5], 1
    %132 = vsyncpa [#allocation8], 1
    %133 = vsyncpa [#allocation6], 1

</llo_original>
